<compile_context>
chip_gen: v5e
topology: v5e:2x2
jax: 0.10.0
libtpu: 0.0.40
codegen_flags: <defaults>
</compile_context>

<pallas_src>
import jax
import jax.numpy as jnp
from jax import lax
from jax.experimental import pallas as pl
from jax.experimental.pallas import tpu as pltpu

_BN_EPS = 1e-5
_NEG = -1e30              # stand-in for -inf in the max-pool padding
_CONV_PAD_THRESH = -1e29  # anything below this is pool padding -> zero for conv


def _conv_pool_stats_kernel(pat_ref, w_ref, y_ref, psum_ref, psq_ref):
    """Pass 1: fused 3x3/s2 conv + 3x3/s2 maxpool + per-tile BN partial stats.

    pat_ref : (1, 9, Cin, TP)  shared im2col patches (pool padding = -1e30)
    w_ref   : (9, Cm, Cin)     conv weights, one (Cm, Cin) slab per tap
    y_ref   : (1, Cout, TP)    pre-BN output tile (channels on sublanes, f32)
    psum_ref, psq_ref : (1, 1, Cout, 1)  per-tile per-channel sum / sum-of-squares
    """
    cm, cin = w_ref.shape[1], w_ref.shape[2]
    tp = pat_ref.shape[-1]

    acc = jnp.zeros((cm, tp), jnp.float32)
    ext = jnp.full((cin, tp), _NEG, jnp.float32)
    for k in range(9):                            # 9 taps, statically unrolled
        pk = pat_ref[0, k]                        # (Cin, TP), compute dtype
        ext = jnp.maximum(ext, pk.astype(jnp.float32))
        pk_conv = jnp.where(pk < _CONV_PAD_THRESH, jnp.zeros_like(pk), pk)
        acc = acc + jnp.dot(w_ref[k], pk_conv,
                            preferred_element_type=jnp.float32)

    # write both branches into disjoint channel slices (no in-kernel concat)
    y_ref[0, :cm, :] = acc.astype(y_ref.dtype)
    y_ref[0, cm:, :] = ext.astype(y_ref.dtype)

    # per-channel partial sums for the cross-tile BatchNorm reduction
    psum_ref[0, 0, :cm, :] = jnp.sum(acc, axis=1, keepdims=True)
    psum_ref[0, 0, cm:, :] = jnp.sum(ext, axis=1, keepdims=True)
    psq_ref[0, 0, :cm, :] = jnp.sum(acc * acc, axis=1, keepdims=True)
    psq_ref[0, 0, cm:, :] = jnp.sum(ext * ext, axis=1, keepdims=True)


def _bn_relu_kernel(y_ref, scale_ref, shift_ref, o_ref):
    """Pass 2: out = relu(y * scale + shift) with per-channel scale/shift."""
    y = y_ref[0].astype(jnp.float32)              # (Cout, TP)
    out = y * scale_ref[...] + shift_ref[...]     # (Cout,1) broadcasts over lanes
    o_ref[0] = jnp.maximum(out, 0.0).astype(o_ref.dtype)


def enet_initial_block(x_nchw, w_conv, gamma, beta, *,
                       compute_dtype=jnp.float32, tile_sp=None):
    """x_nchw: (N, Cin, H, W); w_conv: (Cm, Cin, 3, 3) PyTorch OIHW layout."""
    N, Cin, H, W = x_nchw.shape
    Cm = w_conv.shape[0]
    Cout = Cm + Cin
    Ho = (H + 2 - 3) // 2 + 1
    Wo = (W + 2 - 3) // 2 + 1
    P = Ho * Wo

    # spatial tile (lane dimension): multiple of 128
    if tile_sp is None:
        tile_sp = min(1024, pl.cdiv(P, 128) * 128)
    assert tile_sp % 128 == 0
    Pp = pl.cdiv(P, tile_sp) * tile_sp
    T = Pp // tile_sp

    x = x_nchw.astype(jnp.float32)
    xp = jnp.pad(x, ((0, 0), (0, 0), (1, 1), (1, 1)), constant_values=_NEG)

    # Shared im2col, channels-first, spatial on the last (lane) dim.
    # TODO(synk): generate the 9 window taps in-kernel from a haloed row tile of
    # the padded input (manual DMA) to remove the remaining 9x HBM expansion.
    cols = []
    for kh in range(3):
        for kw in range(3):
            s = lax.slice(xp, (0, 0, kh, kw),
                          (N, Cin, kh + 2 * (Ho - 1) + 1, kw + 2 * (Wo - 1) + 1),
                          (1, 1, 2, 2))
            cols.append(s.reshape(N, Cin, P))
    patches = jnp.stack(cols, axis=1)                                   # (N,9,Cin,P)
    patches = jnp.pad(patches, ((0, 0), (0, 0), (0, 0), (0, Pp - P)))   # zero tail
    patches = patches.astype(compute_dtype)

    # conv weight: OIHW -> (kh*3+kw, Cm, Cin), matching the patch tap order
    w3 = jnp.transpose(w_conv, (2, 3, 0, 1)).reshape(9, Cm, Cin).astype(compute_dtype)

    cparams = pltpu.CompilerParams(
        dimension_semantics=("parallel", "parallel"),
        vmem_limit_bytes=32 * 1024 * 1024)

    # ---- pass 1: conv + pool + per-tile BN partials -------------------------
    y, psum, psq = pl.pallas_call(
        _conv_pool_stats_kernel,
        grid=(N, T),
        in_specs=[
            pl.BlockSpec((1, 9, Cin, tile_sp), lambda n, t: (n, 0, 0, t)),
            pl.BlockSpec((9, Cm, Cin), lambda n, t: (0, 0, 0)),   # resident
        ],
        out_specs=(
            pl.BlockSpec((1, Cout, tile_sp), lambda n, t: (n, 0, t)),
            pl.BlockSpec((1, 1, Cout, 1), lambda n, t: (n, t, 0, 0)),
            pl.BlockSpec((1, 1, Cout, 1), lambda n, t: (n, t, 0, 0)),
        ),
        out_shape=(
            jax.ShapeDtypeStruct((N, Cout, Pp), jnp.float32),
            jax.ShapeDtypeStruct((N, T, Cout, 1), jnp.float32),
            jax.ShapeDtypeStruct((N, T, Cout, 1), jnp.float32),
        ),
        compiler_params=cparams,
    )(patches, w3)

    # ---- combine BN partials (tiny, wrapper-side) ---------------------------
    count = jnp.float32(N * P)
    tot = jnp.sum(psum, axis=(0, 1))                  # (Cout, 1)
    totsq = jnp.sum(psq, axis=(0, 1))                 # (Cout, 1)
    mean = tot / count
    var = totsq / count - mean * mean                 # biased var (BN training mode)
    scale = gamma.reshape(Cout, 1).astype(jnp.float32) * lax.rsqrt(var + _BN_EPS)
    shift = beta.reshape(Cout, 1).astype(jnp.float32) - mean * scale
    # TODO(synk): BatchNorm running_mean/running_var updates are stateful training
    # bookkeeping and do not affect the forward output; not reproduced here.

    # ---- pass 2: apply BN + ReLU --------------------------------------------
    out = pl.pallas_call(
        _bn_relu_kernel,
        grid=(N, T),
        in_specs=[
            pl.BlockSpec((1, Cout, tile_sp), lambda n, t: (n, 0, t)),
            pl.BlockSpec((Cout, 1), lambda n, t: (0, 0)),          # resident
            pl.BlockSpec((Cout, 1), lambda n, t: (0, 0)),          # resident
        ],
        out_specs=pl.BlockSpec((1, Cout, tile_sp), lambda n, t: (n, 0, t)),
        out_shape=jax.ShapeDtypeStruct((N, Cout, Pp), jnp.float32),
        compiler_params=cparams,
    )(y, scale, shift)

    # lane-dense (N, Cout, Ho*Wo) -> NCHW needs only a slice + reshape (no transpose)
    return out[:, :, :P].reshape(N, Cout, Ho, Wo)


def _reference(x_nchw, w_conv, gamma, beta):
    """Pure-JAX reference mirroring the PyTorch forward (training-mode BN)."""
    main = lax.conv_general_dilated(
        x_nchw, w_conv, window_strides=(2, 2), padding=((1, 1), (1, 1)),
        dimension_numbers=("NCHW", "OIHW", "NCHW"))
    ext = lax.reduce_window(
        x_nchw, -jnp.inf, lax.max, (1, 1, 3, 3), (1, 1, 2, 2),
        padding=((0, 0), (0, 0), (1, 1), (1, 1)))
    out = jnp.concatenate([main, ext], axis=1)
    mean = jnp.mean(out, axis=(0, 2, 3), keepdims=True)
    var = jnp.mean((out - mean) ** 2, axis=(0, 2, 3), keepdims=True)
    out = (out - mean) / jnp.sqrt(var + _BN_EPS)
    out = out * gamma.reshape(1, -1, 1, 1) + beta.reshape(1, -1, 1, 1)
    return jnp.maximum(out, 0.0)


if __name__ == "__main__":
    key = jax.random.PRNGKey(0)
    kx, kw, kg, kb = jax.random.split(key, 4)

    def make_inputs(n, cin, h, w, cout):
        cm = cout - 3
        x = jax.random.normal(kx, (n, cin, h, w), dtype=jnp.float32)
        wc = 0.1 * jax.random.normal(kw, (cm, cin, 3, 3), dtype=jnp.float32)
        g = 1.0 + 0.1 * jax.random.normal(kg, (cout,), dtype=jnp.float32)
        b = 0.1 * jax.random.normal(kb, (cout,), dtype=jnp.float32)
        return x, wc, g, b

    # (1) canonical small shape, f32 path, tight tolerance
    x, wc, g, b = make_inputs(2, 3, 16, 16, 16)       # maxpool branch => Cin = 3
    out = jax.block_until_ready(enet_initial_block(x, wc, g, b))
    ref = jax.block_until_ready(_reference(x, wc, g, b))
    assert out.shape == (2, 16, 8, 8), out.shape
    assert jnp.allclose(out, ref, rtol=1e-4, atol=1e-4), \
        float(jnp.max(jnp.abs(out - ref)))

    # (2) multi-tile spatial grid (T > 1): exercises the cross-tile BN reduction
    x, wc, g, b = make_inputs(1, 3, 24, 24, 16)
    out = jax.block_until_ready(enet_initial_block(x, wc, g, b, tile_sp=128))
    ref = jax.block_until_ready(_reference(x, wc, g, b))
    assert out.shape == (1, 16, 12, 12), out.shape
    assert jnp.allclose(out, ref, rtol=1e-4, atol=1e-4), \
        float(jnp.max(jnp.abs(out - ref)))

    # (3) bf16 HBM operands (f32 accumulation/statistics), loose tolerance
    x, wc, g, b = make_inputs(2, 3, 16, 16, 16)
    out = jax.block_until_ready(
        enet_initial_block(x, wc, g, b, compute_dtype=jnp.bfloat16))
    ref = jax.block_until_ready(_reference(x, wc, g, b))
    assert jnp.allclose(out, ref, rtol=1e-1, atol=1e-1), \
        float(jnp.max(jnp.abs(out - ref)))

    print("KERNEL_OK")
</pallas_src>

<mosaic_0001>
module attributes {stable_mosaic.version = 11 : i64} {
  func.func @_conv_pool_stats_kernel(%arg0: i32, %arg1: i32, %arg2: memref<1x9x3x128xf32, #tpu.memory_space<vmem>>, %arg3: memref<9x13x3xf32, #tpu.memory_space<vmem>>, %arg4: memref<1x16x128xf32, #tpu.memory_space<vmem>>, %arg5: memref<1x1x16x1xf32, #tpu.memory_space<vmem>>, %arg6: memref<1x1x16x1xf32, #tpu.memory_space<vmem>>) attributes {dimension_semantics = [#tpu.dimension_semantics<parallel>, #tpu.dimension_semantics<parallel>], iteration_bounds = array<i64: 2, 1>, scalar_prefetch = 0 : i64, scratch_operands = 0 : i64, tpu.core_type = #tpu.core_type<tc>, window_params = [{transform_indices = @transform_0, window_bounds = array<i64: 1, 9, 3, 128>}, {pipeline_mode = #tpu.pipeline_mode<synchronous>, transform_indices = @transform_1, window_bounds = array<i64: 9, 13, 3>}, {transform_indices = @transform_2, window_bounds = array<i64: 1, 16, 128>}, {transform_indices = @transform_3, window_bounds = array<i64: 1, 1, 16, 1>}, {transform_indices = @transform_4, window_bounds = array<i64: 1, 1, 16, 1>}]} {
    %cst = arith.constant 0.000000e+00 : f32
    %0 = vector.broadcast %cst : f32 to vector<13x128xf32>
    %cst_0 = arith.constant -1.000000e+30 : f32
    %1 = vector.broadcast %cst_0 : f32 to vector<3x128xf32>
    %c0 = arith.constant 0 : index
    %c0_1 = arith.constant 0 : index
    %c0_2 = arith.constant 0 : index
    %c0_3 = arith.constant 0 : index
    %2 = vector.load %arg2[%c0, %c0_1, %c0_2, %c0_3] : memref<1x9x3x128xf32, #tpu.memory_space<vmem>>, vector<1x1x3x128xf32>
    %3 = vector.shape_cast %2 : vector<1x1x3x128xf32> to vector<3x128xf32>
    %4 = arith.maximumf %1, %3 : vector<3x128xf32>
    %cst_4 = arith.constant -1.000000e+29 : f32
    %5 = vector.broadcast %cst_4 : f32 to vector<3x128xf32>
    %6 = arith.cmpf olt, %3, %5 : vector<3x128xf32>
    %cst_5 = arith.constant 0.000000e+00 : f32
    %7 = vector.broadcast %cst_5 : f32 to vector<3x128xf32>
    %8 = arith.select %6, %7, %3 : vector<3x128xi1>, vector<3x128xf32>
    %c0_6 = arith.constant 0 : index
    %c0_7 = arith.constant 0 : index
    %c0_8 = arith.constant 0 : index
    %9 = vector.load %arg3[%c0_6, %c0_7, %c0_8] : memref<9x13x3xf32, #tpu.memory_space<vmem>>, vector<1x13x3xf32>
    %10 = vector.shape_cast %9 : vector<1x13x3xf32> to vector<13x3xf32>
    %cst_9 = arith.constant dense<0.000000e+00> : vector<13x128xf32>
    %11 = tpu.matmul %10, %8, %cst_9 {dimension_numbers = #tpu.dot_dimension_numbers<[1], [0], [0], [1], [0, 0, 1, 1], [], []>} : vector<13x3xf32>, vector<3x128xf32>, vector<13x128xf32> -> vector<13x128xf32>
    %12 = arith.addf %0, %11 : vector<13x128xf32>
    %c0_10 = arith.constant 0 : index
    %c1 = arith.constant 1 : index
    %c0_11 = arith.constant 0 : index
    %c0_12 = arith.constant 0 : index
    %13 = vector.load %arg2[%c0_10, %c1, %c0_11, %c0_12] : memref<1x9x3x128xf32, #tpu.memory_space<vmem>>, vector<1x1x3x128xf32>
    %14 = vector.shape_cast %13 : vector<1x1x3x128xf32> to vector<3x128xf32>
    %15 = arith.maximumf %4, %14 : vector<3x128xf32>
    %cst_13 = arith.constant -1.000000e+29 : f32
    %16 = vector.broadcast %cst_13 : f32 to vector<3x128xf32>
    %17 = arith.cmpf olt, %14, %16 : vector<3x128xf32>
    %cst_14 = arith.constant 0.000000e+00 : f32
    %18 = vector.broadcast %cst_14 : f32 to vector<3x128xf32>
    %19 = arith.select %17, %18, %14 : vector<3x128xi1>, vector<3x128xf32>
    %c1_15 = arith.constant 1 : index
    %c0_16 = arith.constant 0 : index
    %c0_17 = arith.constant 0 : index
    %20 = vector.load %arg3[%c1_15, %c0_16, %c0_17] : memref<9x13x3xf32, #tpu.memory_space<vmem>>, vector<1x13x3xf32>
    %21 = vector.shape_cast %20 : vector<1x13x3xf32> to vector<13x3xf32>
    %cst_18 = arith.constant dense<0.000000e+00> : vector<13x128xf32>
    %22 = tpu.matmul %21, %19, %cst_18 {dimension_numbers = #tpu.dot_dimension_numbers<[1], [0], [0], [1], [0, 0, 1, 1], [], []>} : vector<13x3xf32>, vector<3x128xf32>, vector<13x128xf32> -> vector<13x128xf32>
    %23 = arith.addf %12, %22 : vector<13x128xf32>
    %c0_19 = arith.constant 0 : index
    %c2 = arith.constant 2 : index
    %c0_20 = arith.constant 0 : index
    %c0_21 = arith.constant 0 : index
    %24 = vector.load %arg2[%c0_19, %c2, %c0_20, %c0_21] : memref<1x9x3x128xf32, #tpu.memory_space<vmem>>, vector<1x1x3x128xf32>
    %25 = vector.shape_cast %24 : vector<1x1x3x128xf32> to vector<3x128xf32>
    %26 = arith.maximumf %15, %25 : vector<3x128xf32>
    %cst_22 = arith.constant -1.000000e+29 : f32
    %27 = vector.broadcast %cst_22 : f32 to vector<3x128xf32>
    %28 = arith.cmpf olt, %25, %27 : vector<3x128xf32>
    %cst_23 = arith.constant 0.000000e+00 : f32
    %29 = vector.broadcast %cst_23 : f32 to vector<3x128xf32>
    %30 = arith.select %28, %29, %25 : vector<3x128xi1>, vector<3x128xf32>
    %c2_24 = arith.constant 2 : index
    %c0_25 = arith.constant 0 : index
    %c0_26 = arith.constant 0 : index
    %31 = vector.load %arg3[%c2_24, %c0_25, %c0_26] : memref<9x13x3xf32, #tpu.memory_space<vmem>>, vector<1x13x3xf32>
    %32 = vector.shape_cast %31 : vector<1x13x3xf32> to vector<13x3xf32>
    %cst_27 = arith.constant dense<0.000000e+00> : vector<13x128xf32>
    %33 = tpu.matmul %32, %30, %cst_27 {dimension_numbers = #tpu.dot_dimension_numbers<[1], [0], [0], [1], [0, 0, 1, 1], [], []>} : vector<13x3xf32>, vector<3x128xf32>, vector<13x128xf32> -> vector<13x128xf32>
    %34 = arith.addf %23, %33 : vector<13x128xf32>
    %c0_28 = arith.constant 0 : index
    %c3 = arith.constant 3 : index
    %c0_29 = arith.constant 0 : index
    %c0_30 = arith.constant 0 : index
    %35 = vector.load %arg2[%c0_28, %c3, %c0_29, %c0_30] : memref<1x9x3x128xf32, #tpu.memory_space<vmem>>, vector<1x1x3x128xf32>
    %36 = vector.shape_cast %35 : vector<1x1x3x128xf32> to vector<3x128xf32>
    %37 = arith.maximumf %26, %36 : vector<3x128xf32>
    %cst_31 = arith.constant -1.000000e+29 : f32
    %38 = vector.broadcast %cst_31 : f32 to vector<3x128xf32>
    %39 = arith.cmpf olt, %36, %38 : vector<3x128xf32>
    %cst_32 = arith.constant 0.000000e+00 : f32
    %40 = vector.broadcast %cst_32 : f32 to vector<3x128xf32>
    %41 = arith.select %39, %40, %36 : vector<3x128xi1>, vector<3x128xf32>
    %c3_33 = arith.constant 3 : index
    %c0_34 = arith.constant 0 : index
    %c0_35 = arith.constant 0 : index
    %42 = vector.load %arg3[%c3_33, %c0_34, %c0_35] : memref<9x13x3xf32, #tpu.memory_space<vmem>>, vector<1x13x3xf32>
    %43 = vector.shape_cast %42 : vector<1x13x3xf32> to vector<13x3xf32>
    %cst_36 = arith.constant dense<0.000000e+00> : vector<13x128xf32>
    %44 = tpu.matmul %43, %41, %cst_36 {dimension_numbers = #tpu.dot_dimension_numbers<[1], [0], [0], [1], [0, 0, 1, 1], [], []>} : vector<13x3xf32>, vector<3x128xf32>, vector<13x128xf32> -> vector<13x128xf32>
    %45 = arith.addf %34, %44 : vector<13x128xf32>
    %c0_37 = arith.constant 0 : index
    %c4 = arith.constant 4 : index
    %c0_38 = arith.constant 0 : index
    %c0_39 = arith.constant 0 : index
    %46 = vector.load %arg2[%c0_37, %c4, %c0_38, %c0_39] : memref<1x9x3x128xf32, #tpu.memory_space<vmem>>, vector<1x1x3x128xf32>
    %47 = vector.shape_cast %46 : vector<1x1x3x128xf32> to vector<3x128xf32>
    %48 = arith.maximumf %37, %47 : vector<3x128xf32>
    %cst_40 = arith.constant -1.000000e+29 : f32
    %49 = vector.broadcast %cst_40 : f32 to vector<3x128xf32>
    %50 = arith.cmpf olt, %47, %49 : vector<3x128xf32>
    %cst_41 = arith.constant 0.000000e+00 : f32
    %51 = vector.broadcast %cst_41 : f32 to vector<3x128xf32>
    %52 = arith.select %50, %51, %47 : vector<3x128xi1>, vector<3x128xf32>
    %c4_42 = arith.constant 4 : index
    %c0_43 = arith.constant 0 : index
    %c0_44 = arith.constant 0 : index
    %53 = vector.load %arg3[%c4_42, %c0_43, %c0_44] : memref<9x13x3xf32, #tpu.memory_space<vmem>>, vector<1x13x3xf32>
    %54 = vector.shape_cast %53 : vector<1x13x3xf32> to vector<13x3xf32>
    %cst_45 = arith.constant dense<0.000000e+00> : vector<13x128xf32>
    %55 = tpu.matmul %54, %52, %cst_45 {dimension_numbers = #tpu.dot_dimension_numbers<[1], [0], [0], [1], [0, 0, 1, 1], [], []>} : vector<13x3xf32>, vector<3x128xf32>, vector<13x128xf32> -> vector<13x128xf32>
    %56 = arith.addf %45, %55 : vector<13x128xf32>
    %c0_46 = arith.constant 0 : index
    %c5 = arith.constant 5 : index
    %c0_47 = arith.constant 0 : index
    %c0_48 = arith.constant 0 : index
    %57 = vector.load %arg2[%c0_46, %c5, %c0_47, %c0_48] : memref<1x9x3x128xf32, #tpu.memory_space<vmem>>, vector<1x1x3x128xf32>
    %58 = vector.shape_cast %57 : vector<1x1x3x128xf32> to vector<3x128xf32>
    %59 = arith.maximumf %48, %58 : vector<3x128xf32>
    %cst_49 = arith.constant -1.000000e+29 : f32
    %60 = vector.broadcast %cst_49 : f32 to vector<3x128xf32>
    %61 = arith.cmpf olt, %58, %60 : vector<3x128xf32>
    %cst_50 = arith.constant 0.000000e+00 : f32
    %62 = vector.broadcast %cst_50 : f32 to vector<3x128xf32>
    %63 = arith.select %61, %62, %58 : vector<3x128xi1>, vector<3x128xf32>
    %c5_51 = arith.constant 5 : index
    %c0_52 = arith.constant 0 : index
    %c0_53 = arith.constant 0 : index
    %64 = vector.load %arg3[%c5_51, %c0_52, %c0_53] : memref<9x13x3xf32, #tpu.memory_space<vmem>>, vector<1x13x3xf32>
    %65 = vector.shape_cast %64 : vector<1x13x3xf32> to vector<13x3xf32>
    %cst_54 = arith.constant dense<0.000000e+00> : vector<13x128xf32>
    %66 = tpu.matmul %65, %63, %cst_54 {dimension_numbers = #tpu.dot_dimension_numbers<[1], [0], [0], [1], [0, 0, 1, 1], [], []>} : vector<13x3xf32>, vector<3x128xf32>, vector<13x128xf32> -> vector<13x128xf32>
    %67 = arith.addf %56, %66 : vector<13x128xf32>
    %c0_55 = arith.constant 0 : index
    %c6 = arith.constant 6 : index
    %c0_56 = arith.constant 0 : index
    %c0_57 = arith.constant 0 : index
    %68 = vector.load %arg2[%c0_55, %c6, %c0_56, %c0_57] : memref<1x9x3x128xf32, #tpu.memory_space<vmem>>, vector<1x1x3x128xf32>
    %69 = vector.shape_cast %68 : vector<1x1x3x128xf32> to vector<3x128xf32>
    %70 = arith.maximumf %59, %69 : vector<3x128xf32>
    %cst_58 = arith.constant -1.000000e+29 : f32
    %71 = vector.broadcast %cst_58 : f32 to vector<3x128xf32>
    %72 = arith.cmpf olt, %69, %71 : vector<3x128xf32>
    %cst_59 = arith.constant 0.000000e+00 : f32
    %73 = vector.broadcast %cst_59 : f32 to vector<3x128xf32>
    %74 = arith.select %72, %73, %69 : vector<3x128xi1>, vector<3x128xf32>
    %c6_60 = arith.constant 6 : index
    %c0_61 = arith.constant 0 : index
    %c0_62 = arith.constant 0 : index
    %75 = vector.load %arg3[%c6_60, %c0_61, %c0_62] : memref<9x13x3xf32, #tpu.memory_space<vmem>>, vector<1x13x3xf32>
    %76 = vector.shape_cast %75 : vector<1x13x3xf32> to vector<13x3xf32>
    %cst_63 = arith.constant dense<0.000000e+00> : vector<13x128xf32>
    %77 = tpu.matmul %76, %74, %cst_63 {dimension_numbers = #tpu.dot_dimension_numbers<[1], [0], [0], [1], [0, 0, 1, 1], [], []>} : vector<13x3xf32>, vector<3x128xf32>, vector<13x128xf32> -> vector<13x128xf32>
    %78 = arith.addf %67, %77 : vector<13x128xf32>
    %c0_64 = arith.constant 0 : index
    %c7 = arith.constant 7 : index
    %c0_65 = arith.constant 0 : index
    %c0_66 = arith.constant 0 : index
    %79 = vector.load %arg2[%c0_64, %c7, %c0_65, %c0_66] : memref<1x9x3x128xf32, #tpu.memory_space<vmem>>, vector<1x1x3x128xf32>
    %80 = vector.shape_cast %79 : vector<1x1x3x128xf32> to vector<3x128xf32>
    %81 = arith.maximumf %70, %80 : vector<3x128xf32>
    %cst_67 = arith.constant -1.000000e+29 : f32
    %82 = vector.broadcast %cst_67 : f32 to vector<3x128xf32>
    %83 = arith.cmpf olt, %80, %82 : vector<3x128xf32>
    %cst_68 = arith.constant 0.000000e+00 : f32
    %84 = vector.broadcast %cst_68 : f32 to vector<3x128xf32>
    %85 = arith.select %83, %84, %80 : vector<3x128xi1>, vector<3x128xf32>
    %c7_69 = arith.constant 7 : index
    %c0_70 = arith.constant 0 : index
    %c0_71 = arith.constant 0 : index
    %86 = vector.load %arg3[%c7_69, %c0_70, %c0_71] : memref<9x13x3xf32, #tpu.memory_space<vmem>>, vector<1x13x3xf32>
    %87 = vector.shape_cast %86 : vector<1x13x3xf32> to vector<13x3xf32>
    %cst_72 = arith.constant dense<0.000000e+00> : vector<13x128xf32>
    %88 = tpu.matmul %87, %85, %cst_72 {dimension_numbers = #tpu.dot_dimension_numbers<[1], [0], [0], [1], [0, 0, 1, 1], [], []>} : vector<13x3xf32>, vector<3x128xf32>, vector<13x128xf32> -> vector<13x128xf32>
    %89 = arith.addf %78, %88 : vector<13x128xf32>
    %c0_73 = arith.constant 0 : index
    %c8 = arith.constant 8 : index
    %c0_74 = arith.constant 0 : index
    %c0_75 = arith.constant 0 : index
    %90 = vector.load %arg2[%c0_73, %c8, %c0_74, %c0_75] : memref<1x9x3x128xf32, #tpu.memory_space<vmem>>, vector<1x1x3x128xf32>
    %91 = vector.shape_cast %90 : vector<1x1x3x128xf32> to vector<3x128xf32>
    %92 = arith.maximumf %81, %91 : vector<3x128xf32>
    %cst_76 = arith.constant -1.000000e+29 : f32
    %93 = vector.broadcast %cst_76 : f32 to vector<3x128xf32>
    %94 = arith.cmpf olt, %91, %93 : vector<3x128xf32>
    %cst_77 = arith.constant 0.000000e+00 : f32
    %95 = vector.broadcast %cst_77 : f32 to vector<3x128xf32>
    %96 = arith.select %94, %95, %91 : vector<3x128xi1>, vector<3x128xf32>
    %c8_78 = arith.constant 8 : index
    %c0_79 = arith.constant 0 : index
    %c0_80 = arith.constant 0 : index
    %97 = vector.load %arg3[%c8_78, %c0_79, %c0_80] : memref<9x13x3xf32, #tpu.memory_space<vmem>>, vector<1x13x3xf32>
    %98 = vector.shape_cast %97 : vector<1x13x3xf32> to vector<13x3xf32>
    %cst_81 = arith.constant dense<0.000000e+00> : vector<13x128xf32>
    %99 = tpu.matmul %98, %96, %cst_81 {dimension_numbers = #tpu.dot_dimension_numbers<[1], [0], [0], [1], [0, 0, 1, 1], [], []>} : vector<13x3xf32>, vector<3x128xf32>, vector<13x128xf32> -> vector<13x128xf32>
    %100 = arith.addf %89, %99 : vector<13x128xf32>
    %c0_82 = arith.constant 0 : index
    %c0_83 = arith.constant 0 : index
    %c0_84 = arith.constant 0 : index
    %101 = vector.load %arg4[%c0_82, %c0_83, %c0_84] : memref<1x16x128xf32, #tpu.memory_space<vmem>>, vector<1x13x128xf32>
    %102 = vector.shape_cast %101 : vector<1x13x128xf32> to vector<13x128xf32>
    %103 = vector.shape_cast %100 : vector<13x128xf32> to vector<1x13x128xf32>
    tpu.vector_store %arg4[%c0_82, %c0_83, %c0_84], %103 {strides = array<i32>} : memref<1x16x128xf32, #tpu.memory_space<vmem>>, vector<1x13x128xf32>,
    %c0_85 = arith.constant 0 : index
    %c13 = arith.constant 13 : index
    %c0_86 = arith.constant 0 : index
    %104 = vector.load %arg4[%c0_85, %c13, %c0_86] : memref<1x16x128xf32, #tpu.memory_space<vmem>>, vector<1x3x128xf32>
    %105 = vector.shape_cast %104 : vector<1x3x128xf32> to vector<3x128xf32>
    %106 = vector.shape_cast %92 : vector<3x128xf32> to vector<1x3x128xf32>
    tpu.vector_store %arg4[%c0_85, %c13, %c0_86], %106 {strides = array<i32>} : memref<1x16x128xf32, #tpu.memory_space<vmem>>, vector<1x3x128xf32>,
    %cst_87 = arith.constant dense<0.000000e+00> : vector<13xf32>
    %107 = vector.multi_reduction <add>, %100, %cst_87 [1] : vector<13x128xf32> to vector<13xf32>
    %108 = vector.shape_cast %107 : vector<13xf32> to vector<13x1xf32>
    %c0_88 = arith.constant 0 : index
    %c0_89 = arith.constant 0 : index
    %c0_90 = arith.constant 0 : index
    %c0_91 = arith.constant 0 : index
    %109 = vector.load %arg5[%c0_88, %c0_89, %c0_90, %c0_91] : memref<1x1x16x1xf32, #tpu.memory_space<vmem>>, vector<1x1x13x1xf32>
    %110 = vector.shape_cast %109 : vector<1x1x13x1xf32> to vector<13x1xf32>
    %111 = vector.shape_cast %108 : vector<13x1xf32> to vector<1x1x13x1xf32>
    tpu.vector_store %arg5[%c0_88, %c0_89, %c0_90, %c0_91], %111 {strides = array<i32>} : memref<1x1x16x1xf32, #tpu.memory_space<vmem>>, vector<1x1x13x1xf32>,
    %cst_92 = arith.constant dense<0.000000e+00> : vector<3xf32>
    %112 = vector.multi_reduction <add>, %92, %cst_92 [1] : vector<3x128xf32> to vector<3xf32>
    %113 = vector.shape_cast %112 : vector<3xf32> to vector<3x1xf32>
    %c0_93 = arith.constant 0 : index
    %c0_94 = arith.constant 0 : index
    %c13_95 = arith.constant 13 : index
    %c0_96 = arith.constant 0 : index
    %114 = vector.load %arg5[%c0_93, %c0_94, %c13_95, %c0_96] : memref<1x1x16x1xf32, #tpu.memory_space<vmem>>, vector<1x1x3x1xf32>
    %115 = vector.shape_cast %114 : vector<1x1x3x1xf32> to vector<3x1xf32>
    %116 = vector.shape_cast %113 : vector<3x1xf32> to vector<1x1x3x1xf32>
    tpu.vector_store %arg5[%c0_93, %c0_94, %c13_95, %c0_96], %116 {strides = array<i32>} : memref<1x1x16x1xf32, #tpu.memory_space<vmem>>, vector<1x1x3x1xf32>,
    %117 = arith.mulf %100, %100 : vector<13x128xf32>
    %cst_97 = arith.constant dense<0.000000e+00> : vector<13xf32>
    %118 = vector.multi_reduction <add>, %117, %cst_97 [1] : vector<13x128xf32> to vector<13xf32>
    %119 = vector.shape_cast %118 : vector<13xf32> to vector<13x1xf32>
    %c0_98 = arith.constant 0 : index
    %c0_99 = arith.constant 0 : index
    %c0_100 = arith.constant 0 : index
    %c0_101 = arith.constant 0 : index
    %120 = vector.load %arg6[%c0_98, %c0_99, %c0_100, %c0_101] : memref<1x1x16x1xf32, #tpu.memory_space<vmem>>, vector<1x1x13x1xf32>
    %121 = vector.shape_cast %120 : vector<1x1x13x1xf32> to vector<13x1xf32>
    %122 = vector.shape_cast %119 : vector<13x1xf32> to vector<1x1x13x1xf32>
    tpu.vector_store %arg6[%c0_98, %c0_99, %c0_100, %c0_101], %122 {strides = array<i32>} : memref<1x1x16x1xf32, #tpu.memory_space<vmem>>, vector<1x1x13x1xf32>,
    %123 = arith.mulf %92, %92 : vector<3x128xf32>
    %cst_102 = arith.constant dense<0.000000e+00> : vector<3xf32>
    %124 = vector.multi_reduction <add>, %123, %cst_102 [1] : vector<3x128xf32> to vector<3xf32>
    %125 = vector.shape_cast %124 : vector<3xf32> to vector<3x1xf32>
    %c0_103 = arith.constant 0 : index
    %c0_104 = arith.constant 0 : index
    %c13_105 = arith.constant 13 : index
    %c0_106 = arith.constant 0 : index
    %126 = vector.load %arg6[%c0_103, %c0_104, %c13_105, %c0_106] : memref<1x1x16x1xf32, #tpu.memory_space<vmem>>, vector<1x1x3x1xf32>
    %127 = vector.shape_cast %126 : vector<1x1x3x1xf32> to vector<3x1xf32>
    %128 = vector.shape_cast %125 : vector<3x1xf32> to vector<1x1x3x1xf32>
    tpu.vector_store %arg6[%c0_103, %c0_104, %c13_105, %c0_106], %128 {strides = array<i32>} : memref<1x1x16x1xf32, #tpu.memory_space<vmem>>, vector<1x1x3x1xf32>,
    return
  }
  func.func @transform_0(%arg0: i32, %arg1: i32) -> (i32, i32, i32, i32) {
    %c0_i32 = arith.constant 0 : i32
    %c0_i32_0 = arith.constant 0 : i32
    %c0_i32_1 = arith.constant 0 : i32
    return %arg0, %c0_i32, %c0_i32_0, %arg1 : i32, i32, i32, i32
  }
  func.func @transform_1(%arg0: i32, %arg1: i32) -> (i32, i32, i32) {
    %c0_i32 = arith.constant 0 : i32
    %c0_i32_0 = arith.constant 0 : i32
    %c0_i32_1 = arith.constant 0 : i32
    %c0_i32_2 = arith.constant 0 : i32
    return %c0_i32, %c0_i32_0, %c0_i32_1 : i32, i32, i32
  }
  func.func @transform_2(%arg0: i32, %arg1: i32) -> (i32, i32, i32) {
    %c0_i32 = arith.constant 0 : i32
    %c0_i32_0 = arith.constant 0 : i32
    return %arg0, %c0_i32, %arg1 : i32, i32, i32
  }
  func.func @transform_3(%arg0: i32, %arg1: i32) -> (i32, i32, i32, i32) {
    %c0_i32 = arith.constant 0 : i32
    %c0_i32_0 = arith.constant 0 : i32
    %c0_i32_1 = arith.constant 0 : i32
    return %arg0, %arg1, %c0_i32, %c0_i32_0 : i32, i32, i32, i32
  }
  func.func @transform_4(%arg0: i32, %arg1: i32) -> (i32, i32, i32, i32) {
    %c0_i32 = arith.constant 0 : i32
    %c0_i32_0 = arith.constant 0 : i32
    %c0_i32_1 = arith.constant 0 : i32
    return %arg0, %arg1, %c0_i32, %c0_i32_0 : i32, i32, i32, i32
  }
}

</mosaic_0001>

<llo_original>
// kernel: tpu_custom_call.1
$region0: #{tpu_custom_call.1}
  #allocation0 [shape = 'u32[]', space=smem, size = 0x4, offset = 0x4, fixed_abs, tag = 'smem constant byte address 0x4 - core index']
  #allocation1 [shape = 'u32[72,128]{1,0:T(1,128)}', space=vmem, size = 0x9000, scoped, tag = 'internal scratch']
  %s0 = inlined_call_operand.vmem [shape: f32[2,9,3,128], index: 0, kind: input, shape index: {}]
  %s1 = inlined_call_operand.vmem [shape: f32[9,13,3], index: 1, kind: input, shape index: {}]
  %s2 = inlined_call_operand.hbm [shape: f32[2,16,128], index: 2, kind: output, shape index: {0}]
  %s3 = inlined_call_operand.vmem [shape: f32[2,1,16,1], index: 3, kind: output, shape index: {1}]
  %s4 = inlined_call_operand.vmem [shape: f32[2,1,16,1], index: 4, kind: output, shape index: {2}]
  %5 = xla_tuple %s2, %s3, %s4
  %s6 = sld [smem:[#allocation0]]
  $region57: #{tpu_custom_call.1} parent=0
    _
  %s8 = ssub.s32 1, %s6
  %s9 = scalar_select 0, %s8, %s6
  $region1: #{tpu_custom_call.1} parent=0
    #allocation2 [shape = 'u8[16384]{0}', space=vmem, size = 0x4000, scoped, tag = 'output window, operand 0']
    #allocation3 [shape = 's32[2]{0}', space=sflag, size = 0x8, scoped, tag = 'scoped memory for tpu_custom_call.1']
    %10 = vsyncpa [#allocation3], 0
    %s11 = scalar_lea.sflag [#allocation3], 1
    %12 = vsyncpa %s11, 0
    loop: start=0, step=1, limit=4
    $region2: #{tpu_custom_call.1} parent=1 // loop_pre_header
      _
    $region3: #{tpu_custom_call.1} parent=1 // loop_header
      %s14 = sphi 0, %s18
      %p15 = scmp.ge.s32.totalorder %s14, 4
      %s21 = sphi 0, %s33
      %s22 = sphi 0, %s29
      %s23 = sphi 0, %s21
      %s24 = sphi 0, %s22
      %s25 = sphi 0, %s23
      %s26 = sphi 0, %s24
      %s38 = sphi 0, %s40
      %s41 = sphi 0, %s38
      %s42 = sphi 0, %s41
      %s58 = sphi 0, %s42
      %s62 = sphi 0, %s62
      %s64 = sphi 0, %s62
      %s65 = sphi 0, %s64
      %s79 = sphi 0, %s65
      %s87 = sphi 0, %s89
      %s90 = sphi 0, %s87
      %s91 = sphi 0, %s90
      %s107 = sphi 0, %s91
      %s115 = sphi 0, %s117
      %s118 = sphi 0, %s115
      %s119 = sphi 0, %s118
      %s135 = sphi 0, %s119
      %s143 = sphi 0, %s145
      %s146 = sphi 0, %s143
      %s147 = sphi 0, %s146
      %s163 = sphi 0, %s147
    $region4: #{tpu_custom_call.1} parent=1 // loop_header_branch
      %17 = sbr.rel (%p15) target = $region8
    $region5: #{tpu_custom_call.1} parent=1 // loop_body
      %s19 = ssub.s32 %s14, 1
      %s20 = ssub.s32 %s14, 2
      %s27 = sadd.s32 1, %s22
      %p28 = scmp.ge.s32.totalorder %s27, 1
      %s29 = scalar_select %p28, 0, %s27
      %s30 = sadd.s32 1, %s21
      %s31 = scalar_select %p28, %s30, %s21
      %p32 = scmp.ge.s32.totalorder %s31, 2
      %s33 = scalar_select %p32, 0, %s31
      %s34 = ssub.s32 %s21, %s33
      %s35 = ssub.s32 %s22, %s29
      %s36 = sor.u32 %s34, %s35
      %p37 = scmp.eq.s32.totalorder %s36, 0
      %s39 = sadd.s32 %s38, 1
      %s40 = scalar_select %p37, %s38, %s39
      %p43 = pneg %p37
      %p44 = scmp.eq.s32.totalorder %s14, 1
      %p45 = por %p43, %p44
      %p46 = scmp.ne.s32.totalorder %s38, %s41
      %p47 = scmp.eq.s32.totalorder %s14, 0
      %p48 = por %p46, %p47
      %p49 = scmp.ne.s32.totalorder %s38, %s41
      %p50 = scmp.eq.s32.totalorder %s19, 1
      %p51 = por %p49, %p50
      %p52 = scmp.ne.s32.totalorder %s41, %s42
      %p53 = scmp.eq.s32.totalorder %s19, 0
      %p54 = por %p52, %p53
      %p55 = scmp.ne.s32.totalorder %s41, %s42
      %p56 = scmp.eq.s32.totalorder %s20, 1
      %p57 = por %p55, %p56
      %p59 = scmp.ne.s32.totalorder %s42, %s58
      %p60 = scmp.eq.s32.totalorder %s20, 0
      %p61 = por %p59, %p60
      %s63 = sadd.s32 %s62, 1
      %p66 = scmp.eq.s32.totalorder %s14, 1
      %p67 = scmp.ne.s32.totalorder %s62, %s64
      %p68 = scmp.eq.s32.totalorder %s14, 0
      %p69 = por %p67, %p68
      %p70 = scmp.ne.s32.totalorder %s62, %s64
      %p71 = scmp.eq.s32.totalorder %s19, 1
      %p72 = por %p70, %p71
      %p73 = scmp.ne.s32.totalorder %s64, %s65
      %p74 = scmp.eq.s32.totalorder %s19, 0
      %p75 = por %p73, %p74
      %p76 = scmp.ne.s32.totalorder %s64, %s65
      %p77 = scmp.eq.s32.totalorder %s20, 1
      %p78 = por %p76, %p77
      %p80 = scmp.ne.s32.totalorder %s65, %s79
      %p81 = scmp.eq.s32.totalorder %s20, 0
      %p82 = por %p80, %p81
      %s83 = ssub.s32 %s21, %s33
      %s84 = ssub.s32 %s22, %s29
      %s85 = sor.u32 %s83, %s84
      %p86 = scmp.eq.s32.totalorder %s85, 0
      %s88 = sadd.s32 %s87, 1
      %s89 = scalar_select %p86, %s87, %s88
      %p92 = pneg %p86
      %p93 = scmp.eq.s32.totalorder %s14, 1
      %p94 = por %p92, %p93
      %p95 = scmp.ne.s32.totalorder %s87, %s90
      %p96 = scmp.eq.s32.totalorder %s14, 0
      %p97 = por %p95, %p96
      %p98 = scmp.ne.s32.totalorder %s87, %s90
      %p99 = scmp.eq.s32.totalorder %s19, 1
      %p100 = por %p98, %p99
      %p101 = scmp.ne.s32.totalorder %s90, %s91
      %p102 = scmp.eq.s32.totalorder %s19, 0
      %p103 = por %p101, %p102
      %p104 = scmp.ne.s32.totalorder %s90, %s91
      %p105 = scmp.eq.s32.totalorder %s20, 1
      %p106 = por %p104, %p105
      %p108 = scmp.ne.s32.totalorder %s91, %s107
      %p109 = scmp.eq.s32.totalorder %s20, 0
      %p110 = por %p108, %p109
      %s111 = ssub.s32 %s21, %s33
      %s112 = ssub.s32 %s22, %s29
      %s113 = sor.u32 %s111, %s112
      %p114 = scmp.eq.s32.totalorder %s113, 0
      %s116 = sadd.s32 %s115, 1
      %s117 = scalar_select %p114, %s115, %s116
      %p120 = pneg %p114
      %p121 = scmp.eq.s32.totalorder %s14, 1
      %p122 = por %p120, %p121
      %p123 = scmp.ne.s32.totalorder %s115, %s118
      %p124 = scmp.eq.s32.totalorder %s14, 0
      %p125 = por %p123, %p124
      %p126 = scmp.ne.s32.totalorder %s115, %s118
      %p127 = scmp.eq.s32.totalorder %s19, 1
      %p128 = por %p126, %p127
      %p129 = scmp.ne.s32.totalorder %s118, %s119
      %p130 = scmp.eq.s32.totalorder %s19, 0
      %p131 = por %p129, %p130
      %p132 = scmp.ne.s32.totalorder %s118, %s119
      %p133 = scmp.eq.s32.totalorder %s20, 1
      %p134 = por %p132, %p133
      %p136 = scmp.ne.s32.totalorder %s119, %s135
      %p137 = scmp.eq.s32.totalorder %s20, 0
      %p138 = por %p136, %p137
      %s139 = ssub.s32 %s21, %s33
      %s140 = ssub.s32 %s22, %s29
      %s141 = sor.u32 %s139, %s140
      %p142 = scmp.eq.s32.totalorder %s141, 0
      %s144 = sadd.s32 %s143, 1
      %s145 = scalar_select %p142, %s143, %s144
      %p148 = pneg %p142
      %p149 = scmp.eq.s32.totalorder %s14, 1
      %p150 = por %p148, %p149
      %p151 = scmp.ne.s32.totalorder %s143, %s146
      %p152 = scmp.eq.s32.totalorder %s14, 0
      %p153 = por %p151, %p152
      %p154 = scmp.ne.s32.totalorder %s143, %s146
      %p155 = scmp.eq.s32.totalorder %s19, 1
      %p156 = por %p154, %p155
      %p157 = scmp.ne.s32.totalorder %s146, %s147
      %p158 = scmp.eq.s32.totalorder %s19, 0
      %p159 = por %p157, %p158
      %p160 = scmp.ne.s32.totalorder %s146, %s147
      %p161 = scmp.eq.s32.totalorder %s20, 1
      %p162 = por %p160, %p161
      %p164 = scmp.ne.s32.totalorder %s147, %s163
      %p165 = scmp.eq.s32.totalorder %s20, 0
      %p166 = por %p164, %p165
      %p167 = scmp.le.s32.totalorder 1, %s14
      %p168 = scmp.lt.s32.totalorder %s14, 3
      %p169 = pnand %p167, %p168
      %p170 = pneg %p169
      // Predicated region
      $region9: #{tpu_custom_call.1} parent=5 // pred_check
        _
      $region10: #{tpu_custom_call.1} parent=5 // pred_check_branch
        %172 = sbr.rel (%p169) target = $region12
      $region11: #{tpu_custom_call.1} parent=5 // pred_region
        %s173 = ssub.s32 %s14, 1
        // Predicated region
        $region13: #{tpu_custom_call.1} parent=11 // pred_check
          %p174 = pneg %p75
        $region14: #{tpu_custom_call.1} parent=11 // pred_check_branch
          %176 = sbr.rel (%p174) target = $region16
        $region15: #{tpu_custom_call.1} parent=11 // pred_region
          _
        $region16: #{tpu_custom_call.1} parent=11 // pred_fallthru
          _
      $region12: #{tpu_custom_call.1} parent=5 // pred_fallthru
        _
      %p177 = scmp.lt.s32.totalorder %s14, 2
      // Predicated region
      $region17: #{tpu_custom_call.1} parent=5 // pred_check
        %p178 = pneg %p177
      $region18: #{tpu_custom_call.1} parent=5 // pred_check_branch
        %180 = sbr.rel (%p178) target = $region20
      $region19: #{tpu_custom_call.1} parent=5 // pred_region
        // Predicated region
        $region21: #{tpu_custom_call.1} parent=19 // pred_check
          %p181 = pneg %p48
        $region22: #{tpu_custom_call.1} parent=19 // pred_check_branch
          %183 = sbr.rel (%p181) target = $region24
        $region23: #{tpu_custom_call.1} parent=19 // pred_region
          %p184 = scmp.lt.s32.totalorder %s21, 1
          %s185 = scalar_select %p184, %s21, 1
          %p186 = scmp.lt.s32.totalorder %s22, 0
          %s187 = scalar_select %p186, %s22, 0
          %s188 = smul.addr %s185, 9
          %s189 = sadd.s32 %s187, %s188
          %s190 = smul.addr %s189, 4
          %s191 = scalar_lea.vmem %s0, %s190
        $region24: #{tpu_custom_call.1} parent=19 // pred_fallthru
          _
      $region20: #{tpu_custom_call.1} parent=5 // pred_fallthru
        _
      %p192 = scmp.le.s32.totalorder 1, %s14
      %p193 = scmp.lt.s32.totalorder %s14, 3
      %p194 = pnand %p192, %p193
      %p195 = pneg %p194
      // Predicated region
      $region25: #{tpu_custom_call.1} parent=5 // pred_check
        _
      $region26: #{tpu_custom_call.1} parent=5 // pred_check_branch
        %197 = sbr.rel (%p194) target = $region28
      $region27: #{tpu_custom_call.1} parent=5 // pred_region
        %s198 = ssub.s32 %s14, 1
        %p199 = scmp.lt.s32.totalorder %s23, 1
        %s200 = scalar_select %p199, %s23, 1
        %p201 = scmp.lt.s32.totalorder %s24, 0
        %s202 = scalar_select %p201, %s24, 0
        %s203 = smul.addr %s200, 9
        %s204 = sadd.s32 %s202, %s203
        %s205 = smul.addr %s204, 4
        %s206 = scalar_lea.vmem %s0, %s205
        %p207 = pneg %p54
        %p208 = pneg %p51
        %p209 = pneg %p75
        %p210 = pneg %p72
        %p211 = pneg %p103
        %p212 = pneg %p100
        %s213 = sand.u32 %s90, 1
        %s214 = scalar_lea.sflag [#allocation3], %s213
        %s215 = sand.u32 %s90, 1
        %s216 = smul.addr %s215, 16
        %s217 = scalar_lea.vmem [#allocation2], %s216
        %p218 = pneg %p131
        %p219 = pneg %p128
        %p220 = scmp.lt.s32.totalorder %s23, 1
        %s221 = scalar_select %p220, %s23, 1
        %p222 = scmp.lt.s32.totalorder %s24, 0
        %s223 = scalar_select %p222, %s24, 0
        %s224 = smul.addr %s223, 2
        %s225 = smul.addr %s221, 2
        %s226 = sadd.s32 %s224, %s225
        %s227 = smul.addr %s226, 8
        %s228 = scalar_lea.vmem %s3, %s227
        %p229 = pneg %p159
        %p230 = pneg %p156
        %p231 = scmp.lt.s32.totalorder %s23, 1
        %s232 = scalar_select %p231, %s23, 1
        %p233 = scmp.lt.s32.totalorder %s24, 0
        %s234 = scalar_select %p233, %s24, 0
        %s235 = smul.addr %s234, 2
        %s236 = smul.addr %s232, 2
        %s237 = sadd.s32 %s235, %s236
        %s238 = smul.addr %s237, 8
        %s239 = scalar_lea.vmem %s4, %s238
        %p240 = scmp.lt.s32.totalorder %s23, 1
        %s241 = scalar_select %p240, %s23, 1
        %p242 = scmp.lt.s32.totalorder %s24, 0
        %s243 = scalar_select %p242, %s24, 0
        %s244 = smul.addr %s241, 9
        %s245 = sadd.s32 %s243, %s244
        %s246 = smul.addr %s245, 4
        %s247 = scalar_lea.vmem %s0, %s246
        %p248 = scmp.lt.s32.totalorder %s23, 1
        %s249 = scalar_select %p248, %s23, 1
        %p250 = scmp.lt.s32.totalorder %s24, 0
        %s251 = scalar_select %p250, %s24, 0
        %s252 = smul.addr %s251, 2
        %s253 = smul.addr %s249, 2
        %s254 = sadd.s32 %s252, %s253
        %s255 = smul.addr %s254, 8
        %s256 = scalar_lea.vmem %s3, %s255
        %p257 = scmp.lt.s32.totalorder %s23, 1
        %s258 = scalar_select %p257, %s23, 1
        %p259 = scmp.lt.s32.totalorder %s24, 0
        %s260 = scalar_select %p259, %s24, 0
        %s261 = smul.addr %s260, 2
        %s262 = smul.addr %s258, 2
        %s263 = sadd.s32 %s261, %s262
        %s264 = smul.addr %s263, 8
        %s265 = scalar_lea.vmem %s4, %s264
        %v266 = vld [vmem:[%s247] sm:$0x7]
        %v267 = vmax.f32 %v266, -1e+30
        %vm268 = vcmp.lt.f32.partialorder %v266, -1e+29
        %v269 = vsel %vm268, 0.0, %v266
        %v270 = vld [vmem:[%s1] sm:$0xff]
        %v271 = vld [vmem:[%s1 + $0x8] sm:$0x1f]
        %s272 = scalar_lea.vmem %s247, 4
        %v273 = vld [vmem:[%s272] sm:$0x7]
        %v274 = vmax.f32 %v267, %v273
        %vm275 = vcmp.lt.f32.partialorder %v273, -1e+29
        %v276 = vsel %vm275, 0.0, %v273
        %s277 = scalar_lea.vmem %s1, 16
        %v278 = vld [vmem:[%s277] sm:$0xff]
        %v279 = vld [vmem:[%s277 + $0x8] sm:$0x1f]
        %vm280 = vcmask 23552
        %v282 = vsel %vm280, %v278, 0
        %v285 = vsel %vm280, %v279, 0
        %vm287 = vcmask 1042432
        %v289 = vsel %vm287, %v276, 0
        %291 = vmatpush.msra.mxu0 0.0
        %292 = vmatpush.msra.mxu0 0.0
        %293 = vmatpush.msra.mxu0 0.0
        %294 = vmatpush.msra.mxu0 0.0
        %295 = vmatpush.msra.mxu0 0.0
        %296 = vmatpush.msra.mxu0 0.0
        %297 = vmatpush.msra.mxu0 0.0
        %298 = vmatpush.msra.mxu0 0.0
        %299 = vmatpush.msra.mxu0 0.0
        %300 = vmatpush.msra.mxu0 0.0
        %301 = vmatpush.msra.mxu0 0.0
        %302 = vmatpush.msra.mxu0 0.0
        %303 = vmatpush.msra.mxu0 0.0
        %304 = vmatpush.msra.mxu0 0.0
        %305 = vmatpush.msra.mxu0 0.0
        %306 = vmatpush.msra.mxu0 %v289
        %307 = vmatmul.f32.gmra.mxu0 %v282
        %v308 = vpop.f32.mrf.mxu0
        %v309 = vadd.f32 0.0, %v308
        %310 = vmatmul.f32.gmra.mxu0 %v285
        %v311 = vpop.f32.mrf.mxu0
        %v312 = vadd.f32 0.0, %v311
        %313 = vdwg.mxu0
        %v315 = vsel %vm280, %v270, 0
        %v318 = vsel %vm280, %v271, 0
        %v321 = vsel %vm287, %v269, 0
        %323 = vmatpush.msra.mxu0 0.0
        %324 = vmatpush.msra.mxu0 0.0
        %325 = vmatpush.msra.mxu0 0.0
        %326 = vmatpush.msra.mxu0 0.0
        %327 = vmatpush.msra.mxu0 0.0
        %328 = vmatpush.msra.mxu0 0.0
        %329 = vmatpush.msra.mxu0 0.0
        %330 = vmatpush.msra.mxu0 0.0
        %331 = vmatpush.msra.mxu0 0.0
        %332 = vmatpush.msra.mxu0 0.0
        %333 = vmatpush.msra.mxu0 0.0
        %334 = vmatpush.msra.mxu0 0.0
        %335 = vmatpush.msra.mxu0 0.0
        %336 = vmatpush.msra.mxu0 0.0
        %337 = vmatpush.msra.mxu0 0.0
        %338 = vmatpush.msra.mxu0 %v321
        %339 = vmatmul.f32.gmra.mxu0 %v315
        %v340 = vpop.f32.mrf.mxu0
        %v341 = vadd.f32 %v309, %v340
        %342 = vmatmul.f32.gmra.mxu0 %v318
        %v343 = vpop.f32.mrf.mxu0
        %v344 = vadd.f32 %v312, %v343
        %345 = vdwg.mxu0
        %s346 = scalar_lea.vmem %s247, 8
        %v347 = vld [vmem:[%s346] sm:$0x7]
        %v348 = vmax.f32 %v274, %v347
        %vm349 = vcmp.lt.f32.partialorder %v347, -1e+29
        %v350 = vsel %vm349, 0.0, %v347
        %s351 = scalar_lea.vmem %s1, 32
        %v352 = vld [vmem:[%s351] sm:$0xff]
        %v353 = vld [vmem:[%s351 + $0x8] sm:$0x1f]
        %v355 = vsel %vm280, %v352, 0
        %v358 = vsel %vm280, %v353, 0
        %v361 = vsel %vm287, %v350, 0
        %363 = vmatpush.msra.mxu0 0.0
        %364 = vmatpush.msra.mxu0 0.0
        %365 = vmatpush.msra.mxu0 0.0
        %366 = vmatpush.msra.mxu0 0.0
        %367 = vmatpush.msra.mxu0 0.0
        %368 = vmatpush.msra.mxu0 0.0
        %369 = vmatpush.msra.mxu0 0.0
        %370 = vmatpush.msra.mxu0 0.0
        %371 = vmatpush.msra.mxu0 0.0
        %372 = vmatpush.msra.mxu0 0.0
        %373 = vmatpush.msra.mxu0 0.0
        %374 = vmatpush.msra.mxu0 0.0
        %375 = vmatpush.msra.mxu0 0.0
        %376 = vmatpush.msra.mxu0 0.0
        %377 = vmatpush.msra.mxu0 0.0
        %378 = vmatpush.msra.mxu0 %v361
        %379 = vmatmul.f32.gmra.mxu0 %v355
        %v380 = vpop.f32.mrf.mxu0
        %v381 = vadd.f32 0.0, %v380
        %382 = vmatmul.f32.gmra.mxu0 %v358
        %v383 = vpop.f32.mrf.mxu0
        %v384 = vadd.f32 0.0, %v383
        %385 = vdwg.mxu0
        %v386 = vadd.f32 %v341, %v381
        %v387 = vadd.f32 %v344, %v384
        %s388 = scalar_lea.vmem %s247, 12
        %v389 = vld [vmem:[%s388] sm:$0x7]
        %v390 = vmax.f32 %v348, %v389
        %vm391 = vcmp.lt.f32.partialorder %v389, -1e+29
        %v392 = vsel %vm391, 0.0, %v389
        %s393 = scalar_lea.vmem %s1, 48
        %v394 = vld [vmem:[%s393] sm:$0xff]
        %v395 = vld [vmem:[%s393 + $0x8] sm:$0x1f]
        %v397 = vsel %vm280, %v394, 0
        %v400 = vsel %vm280, %v395, 0
        %v403 = vsel %vm287, %v392, 0
        %405 = vmatpush.msra.mxu0 0.0
        %406 = vmatpush.msra.mxu0 0.0
        %407 = vmatpush.msra.mxu0 0.0
        %408 = vmatpush.msra.mxu0 0.0
        %409 = vmatpush.msra.mxu0 0.0
        %410 = vmatpush.msra.mxu0 0.0
        %411 = vmatpush.msra.mxu0 0.0
        %412 = vmatpush.msra.mxu0 0.0
        %413 = vmatpush.msra.mxu0 0.0
        %414 = vmatpush.msra.mxu0 0.0
        %415 = vmatpush.msra.mxu0 0.0
        %416 = vmatpush.msra.mxu0 0.0
        %417 = vmatpush.msra.mxu0 0.0
        %418 = vmatpush.msra.mxu0 0.0
        %419 = vmatpush.msra.mxu0 0.0
        %420 = vmatpush.msra.mxu0 %v403
        %421 = vmatmul.f32.gmra.mxu0 %v397
        %v422 = vpop.f32.mrf.mxu0
        %v423 = vadd.f32 0.0, %v422
        %424 = vmatmul.f32.gmra.mxu0 %v400
        %v425 = vpop.f32.mrf.mxu0
        %v426 = vadd.f32 0.0, %v425
        %427 = vdwg.mxu0
        %v428 = vadd.f32 %v386, %v423
        %v429 = vadd.f32 %v387, %v426
        %s430 = scalar_lea.vmem %s247, 16
        %v431 = vld [vmem:[%s430] sm:$0x7]
        %v432 = vmax.f32 %v390, %v431
        %vm433 = vcmp.lt.f32.partialorder %v431, -1e+29
        %v434 = vsel %vm433, 0.0, %v431
        %s435 = scalar_lea.vmem %s1, 64
        %v436 = vld [vmem:[%s435] sm:$0xff]
        %v437 = vld [vmem:[%s435 + $0x8] sm:$0x1f]
        %v439 = vsel %vm280, %v436, 0
        %v442 = vsel %vm280, %v437, 0
        %v445 = vsel %vm287, %v434, 0
        %447 = vmatpush.msra.mxu0 0.0
        %448 = vmatpush.msra.mxu0 0.0
        %449 = vmatpush.msra.mxu0 0.0
        %450 = vmatpush.msra.mxu0 0.0
        %451 = vmatpush.msra.mxu0 0.0
        %452 = vmatpush.msra.mxu0 0.0
        %453 = vmatpush.msra.mxu0 0.0
        %454 = vmatpush.msra.mxu0 0.0
        %455 = vmatpush.msra.mxu0 0.0
        %456 = vmatpush.msra.mxu0 0.0
        %457 = vmatpush.msra.mxu0 0.0
        %458 = vmatpush.msra.mxu0 0.0
        %459 = vmatpush.msra.mxu0 0.0
        %460 = vmatpush.msra.mxu0 0.0
        %461 = vmatpush.msra.mxu0 0.0
        %462 = vmatpush.msra.mxu0 %v445
        %463 = vmatmul.f32.gmra.mxu0 %v439
        %v464 = vpop.f32.mrf.mxu0
        %v465 = vadd.f32 0.0, %v464
        %466 = vmatmul.f32.gmra.mxu0 %v442
        %v467 = vpop.f32.mrf.mxu0
        %v468 = vadd.f32 0.0, %v467
        %469 = vdwg.mxu0
        %v470 = vadd.f32 %v428, %v465
        %v471 = vadd.f32 %v429, %v468
        %s472 = scalar_lea.vmem %s247, 20
        %v473 = vld [vmem:[%s472] sm:$0x7]
        %v474 = vmax.f32 %v432, %v473
        %vm475 = vcmp.lt.f32.partialorder %v473, -1e+29
        %v476 = vsel %vm475, 0.0, %v473
        %s477 = scalar_lea.vmem %s1, 80
        %v478 = vld [vmem:[%s477] sm:$0xff]
        %v479 = vld [vmem:[%s477 + $0x8] sm:$0x1f]
        %v481 = vsel %vm280, %v478, 0
        %v484 = vsel %vm280, %v479, 0
        %v487 = vsel %vm287, %v476, 0
        %489 = vmatpush.msra.mxu0 0.0
        %490 = vmatpush.msra.mxu0 0.0
        %491 = vmatpush.msra.mxu0 0.0
        %492 = vmatpush.msra.mxu0 0.0
        %493 = vmatpush.msra.mxu0 0.0
        %494 = vmatpush.msra.mxu0 0.0
        %495 = vmatpush.msra.mxu0 0.0
        %496 = vmatpush.msra.mxu0 0.0
        %497 = vmatpush.msra.mxu0 0.0
        %498 = vmatpush.msra.mxu0 0.0
        %499 = vmatpush.msra.mxu0 0.0
        %500 = vmatpush.msra.mxu0 0.0
        %501 = vmatpush.msra.mxu0 0.0
        %502 = vmatpush.msra.mxu0 0.0
        %503 = vmatpush.msra.mxu0 0.0
        %504 = vmatpush.msra.mxu0 %v487
        %505 = vmatmul.f32.gmra.mxu0 %v481
        %v506 = vpop.f32.mrf.mxu0
        %v507 = vadd.f32 0.0, %v506
        %508 = vmatmul.f32.gmra.mxu0 %v484
        %v509 = vpop.f32.mrf.mxu0
        %v510 = vadd.f32 0.0, %v509
        %511 = vdwg.mxu0
        %v512 = vadd.f32 %v470, %v507
        %v513 = vadd.f32 %v471, %v510
        %s514 = scalar_lea.vmem %s247, 24
        %v515 = vld [vmem:[%s514] sm:$0x7]
        %v516 = vmax.f32 %v474, %v515
        %vm517 = vcmp.lt.f32.partialorder %v515, -1e+29
        %v518 = vsel %vm517, 0.0, %v515
        %s519 = scalar_lea.vmem %s1, 96
        %v520 = vld [vmem:[%s519] sm:$0xff]
        %v521 = vld [vmem:[%s519 + $0x8] sm:$0x1f]
        %v523 = vsel %vm280, %v520, 0
        %v526 = vsel %vm280, %v521, 0
        %v529 = vsel %vm287, %v518, 0
        %531 = vmatpush.msra.mxu0 0.0
        %532 = vmatpush.msra.mxu0 0.0
        %533 = vmatpush.msra.mxu0 0.0
        %534 = vmatpush.msra.mxu0 0.0
        %535 = vmatpush.msra.mxu0 0.0
        %536 = vmatpush.msra.mxu0 0.0
        %537 = vmatpush.msra.mxu0 0.0
        %538 = vmatpush.msra.mxu0 0.0
        %539 = vmatpush.msra.mxu0 0.0
        %540 = vmatpush.msra.mxu0 0.0
        %541 = vmatpush.msra.mxu0 0.0
        %542 = vmatpush.msra.mxu0 0.0
        %543 = vmatpush.msra.mxu0 0.0
        %544 = vmatpush.msra.mxu0 0.0
        %545 = vmatpush.msra.mxu0 0.0
        %546 = vmatpush.msra.mxu0 %v529
        %547 = vmatmul.f32.gmra.mxu0 %v523
        %v548 = vpop.f32.mrf.mxu0
        %v549 = vadd.f32 0.0, %v548
        %550 = vmatmul.f32.gmra.mxu0 %v526
        %v551 = vpop.f32.mrf.mxu0
        %v552 = vadd.f32 0.0, %v551
        %553 = vdwg.mxu0
        %v554 = vadd.f32 %v512, %v549
        %v555 = vadd.f32 %v513, %v552
        %s556 = scalar_lea.vmem %s247, 28
        %v557 = vld [vmem:[%s556] sm:$0x7]
        %v558 = vmax.f32 %v516, %v557
        %vm559 = vcmp.lt.f32.partialorder %v557, -1e+29
        %v560 = vsel %vm559, 0.0, %v557
        %s561 = scalar_lea.vmem %s1, 112
        %v562 = vld [vmem:[%s561] sm:$0xff]
        %v563 = vld [vmem:[%s561 + $0x8] sm:$0x1f]
        %v565 = vsel %vm280, %v562, 0
        %v568 = vsel %vm280, %v563, 0
        %v571 = vsel %vm287, %v560, 0
        %573 = vmatpush.msra.mxu0 0.0
        %574 = vmatpush.msra.mxu0 0.0
        %575 = vmatpush.msra.mxu0 0.0
        %576 = vmatpush.msra.mxu0 0.0
        %577 = vmatpush.msra.mxu0 0.0
        %578 = vmatpush.msra.mxu0 0.0
        %579 = vmatpush.msra.mxu0 0.0
        %580 = vmatpush.msra.mxu0 0.0
        %581 = vmatpush.msra.mxu0 0.0
        %582 = vmatpush.msra.mxu0 0.0
        %583 = vmatpush.msra.mxu0 0.0
        %584 = vmatpush.msra.mxu0 0.0
        %585 = vmatpush.msra.mxu0 0.0
        %586 = vmatpush.msra.mxu0 0.0
        %587 = vmatpush.msra.mxu0 0.0
        %588 = vmatpush.msra.mxu0 %v571
        %589 = vmatmul.f32.gmra.mxu0 %v565
        %v590 = vpop.f32.mrf.mxu0
        %v591 = vadd.f32 0.0, %v590
        %592 = vmatmul.f32.gmra.mxu0 %v568
        %v593 = vpop.f32.mrf.mxu0
        %v594 = vadd.f32 0.0, %v593
        %595 = vdwg.mxu0
        %v596 = vadd.f32 %v554, %v591
        %v597 = vadd.f32 %v555, %v594
        %s598 = scalar_lea.vmem %s247, 32
        %v599 = vld [vmem:[%s598] sm:$0x7]
        %v600 = vmax.f32 %v558, %v599
        %vm601 = vcmp.lt.f32.partialorder %v599, -1e+29
        %v602 = vsel %vm601, 0.0, %v599
        %s603 = scalar_lea.vmem %s1, 128
        %v604 = vld [vmem:[%s603] sm:$0xff]
        %v605 = vld [vmem:[%s603 + $0x8] sm:$0x1f]
        %v607 = vsel %vm280, %v604, 0
        %v610 = vsel %vm280, %v605, 0
        %v613 = vsel %vm287, %v602, 0
        %615 = vmatpush.msra.mxu0 0.0
        %616 = vmatpush.msra.mxu0 0.0
        %617 = vmatpush.msra.mxu0 0.0
        %618 = vmatpush.msra.mxu0 0.0
        %619 = vmatpush.msra.mxu0 0.0
        %620 = vmatpush.msra.mxu0 0.0
        %621 = vmatpush.msra.mxu0 0.0
        %622 = vmatpush.msra.mxu0 0.0
        %623 = vmatpush.msra.mxu0 0.0
        %624 = vmatpush.msra.mxu0 0.0
        %625 = vmatpush.msra.mxu0 0.0
        %626 = vmatpush.msra.mxu0 0.0
        %627 = vmatpush.msra.mxu0 0.0
        %628 = vmatpush.msra.mxu0 0.0
        %629 = vmatpush.msra.mxu0 0.0
        %630 = vmatpush.msra.mxu0 %v613
        %631 = vmatmul.f32.gmra.mxu0 %v607
        %v632 = vpop.f32.mrf.mxu0
        %v633 = vadd.f32 0.0, %v632
        %634 = vmatmul.f32.gmra.mxu0 %v610
        %v635 = vpop.f32.mrf.mxu0
        %v636 = vadd.f32 0.0, %v635
        %637 = vdwg.mxu0
        %v638 = vadd.f32 %v596, %v633
        %v639 = vadd.f32 %v597, %v636
        %640 = vst [vmem:[%s217] sm:$0xff] %v638
        %641 = vst [vmem:[%s217 + $0x8] sm:$0x1f] %v639
        %642 = vst [vmem:[%s217 + $0xd] sm:$0x7] %v600
        %643 = vadd.xlane.f32.xlu0 %v638
        %v644 = vpop.xlane.xlu0 %643
        %vm645 = vcmask 1044480
        %v646 = vsel %vm645, %v639, 0.0
        %647 = vadd.xlane.f32.xlu0 %v646
        %v648 = vpop.xlane.xlu0 %647
        %vm649 = vcmask 7168
        %650 = vst.msk [vmem:[%s256] sm:$0xff] %vm649, %v644
        %vm651 = vcmask 4096
        %652 = vst.msk [vmem:[%s256 + $0x8] sm:$0x1f] %vm651, %v648
        %v653 = vsel %vm287, %v600, 0.0
        %654 = vadd.xlane.f32.xlu0 %v653
        %v655 = vpop.xlane.xlu0 %654
        %vm656 = vcmask 2048
        %657 = vst.msk [vmem:[%s256 + $0xd] sm:$0x7] %vm656, %v655
        %v658 = vmul.f32 %v638, %v638
        %v659 = vmul.f32 %v639, %v639
        %660 = vadd.xlane.f32.xlu0 %v658
        %v661 = vpop.xlane.xlu0 %660
        %v662 = vsel %vm645, %v659, 0.0
        %663 = vadd.xlane.f32.xlu0 %v662
        %v664 = vpop.xlane.xlu0 %663
        %665 = vst.msk [vmem:[%s265] sm:$0xff] %vm649, %v661
        %666 = vst.msk [vmem:[%s265 + $0x8] sm:$0x1f] %vm651, %v664
        %v667 = vmul.f32 %v600, %v600
        %v668 = vsel %vm287, %v667, 0.0
        %669 = vadd.xlane.f32.xlu0 %v668
        %v670 = vpop.xlane.xlu0 %669
        %671 = vst.msk [vmem:[%s265 + $0xd] sm:$0x7] %vm656, %v670
        %s672 = sand.u32 %s90, 1
        %s673 = scalar_lea.sflag [#allocation3], %s672
        %s674 = sand.u32 %s90, 1
        %s675 = smul.addr %s674, 16
        %s676 = scalar_lea.vmem [#allocation2], %s675
        %p677 = scmp.lt.s32.totalorder %s23, 1
        %s678 = scalar_select %p677, %s23, 1
        %p679 = scmp.lt.s32.totalorder %s24, 0
        %s680 = scalar_select %p679, %s24, 0
        %s681 = smul.addr %s680, 2
        %s682 = smul.addr %s678, 2
        %s683 = sadd.s32 %s681, %s682
        %s684 = smul.addr %s683, 8
        %s685 = scalar_lea.vmem %s3, %s684
        %p686 = scmp.lt.s32.totalorder %s23, 1
        %s687 = scalar_select %p686, %s23, 1
        %p688 = scmp.lt.s32.totalorder %s24, 0
        %s689 = scalar_select %p688, %s24, 0
        %s690 = smul.addr %s689, 2
        %s691 = smul.addr %s687, 2
        %s692 = sadd.s32 %s690, %s691
        %s693 = smul.addr %s692, 8
        %s694 = scalar_lea.vmem %s4, %s693
        // Predicated region
        $region29: #{tpu_custom_call.1} parent=27 // pred_check
          %p695 = pneg %p100
        $region30: #{tpu_custom_call.1} parent=27 // pred_check_branch
          %697 = sbr.rel (%p695) target = $region32
        $region31: #{tpu_custom_call.1} parent=27 // pred_region
          %699 = vsyncadd %s673, 0
          %s700 = smul.addr %s23, 2
          %s701 = sadd.s32 %s24, %s700
          %s702 = smul.addr %s701, 8
          %s703 = scalar_lea.hbm %s2, %s702
          %s704 = sshll.u32 %s676, 4
          %s705 = int_to_ptr.vmem [resolvable:$true] %s704
          %s706 = sshll.u32 %s703, 4
          %s707 = int_to_ptr.hbm [resolvable:$true] %s706
          %712 = dma.vmem_to_hbm [thread:$0]  %s705, 256, %s707, %s673, 128, 128, 8
        $region32: #{tpu_custom_call.1} parent=27 // pred_fallthru
          _
        // Predicated region
        $region33: #{tpu_custom_call.1} parent=27 // pred_check
          %p713 = pneg %p128
        $region34: #{tpu_custom_call.1} parent=27 // pred_check_branch
          %715 = sbr.rel (%p713) target = $region36
        $region35: #{tpu_custom_call.1} parent=27 // pred_region
          _
        $region36: #{tpu_custom_call.1} parent=27 // pred_fallthru
          _
        // Predicated region
        $region37: #{tpu_custom_call.1} parent=27 // pred_check
          %p716 = pneg %p156
        $region38: #{tpu_custom_call.1} parent=27 // pred_check_branch
          %718 = sbr.rel (%p716) target = $region40
        $region39: #{tpu_custom_call.1} parent=27 // pred_region
          _
        $region40: #{tpu_custom_call.1} parent=27 // pred_fallthru
          _
      $region28: #{tpu_custom_call.1} parent=5 // pred_fallthru
        _
      %p719 = scmp.le.s32.totalorder 2, %s14
      // Predicated region
      $region41: #{tpu_custom_call.1} parent=5 // pred_check
        %p720 = pneg %p719
      $region42: #{tpu_custom_call.1} parent=5 // pred_check_branch
        %722 = sbr.rel (%p720) target = $region44
      $region43: #{tpu_custom_call.1} parent=5 // pred_region
        %s723 = ssub.s32 %s14, 2
        // Predicated region
        $region45: #{tpu_custom_call.1} parent=43 // pred_check
          %p724 = pneg %p106
        $region46: #{tpu_custom_call.1} parent=43 // pred_check_branch
          %726 = sbr.rel (%p724) target = $region48
        $region47: #{tpu_custom_call.1} parent=43 // pred_region
          %s727 = sand.u32 %s91, 1
          %s728 = scalar_lea.sflag [#allocation3], %s727
          %s729 = sand.u32 %s91, 1
          %s730 = smul.addr %s729, 16
          %s731 = scalar_lea.vmem [#allocation2], %s730
          %733 = dma.done %s728, 256
        $region48: #{tpu_custom_call.1} parent=43 // pred_fallthru
          _
        // Predicated region
        $region49: #{tpu_custom_call.1} parent=43 // pred_check
          %p734 = pneg %p134
        $region50: #{tpu_custom_call.1} parent=43 // pred_check_branch
          %736 = sbr.rel (%p734) target = $region52
        $region51: #{tpu_custom_call.1} parent=43 // pred_region
          %p737 = scmp.lt.s32.totalorder %s25, 1
          %s738 = scalar_select %p737, %s25, 1
          %p739 = scmp.lt.s32.totalorder %s26, 0
          %s740 = scalar_select %p739, %s26, 0
          %s741 = smul.addr %s740, 2
          %s742 = smul.addr %s738, 2
          %s743 = sadd.s32 %s741, %s742
          %s744 = smul.addr %s743, 8
          %s745 = scalar_lea.vmem %s3, %s744
        $region52: #{tpu_custom_call.1} parent=43 // pred_fallthru
          _
        // Predicated region
        $region53: #{tpu_custom_call.1} parent=43 // pred_check
          %p746 = pneg %p162
        $region54: #{tpu_custom_call.1} parent=43 // pred_check_branch
          %748 = sbr.rel (%p746) target = $region56
        $region55: #{tpu_custom_call.1} parent=43 // pred_region
          %p749 = scmp.lt.s32.totalorder %s25, 1
          %s750 = scalar_select %p749, %s25, 1
          %p751 = scmp.lt.s32.totalorder %s26, 0
          %s752 = scalar_select %p751, %s26, 0
          %s753 = smul.addr %s752, 2
          %s754 = smul.addr %s750, 2
          %s755 = sadd.s32 %s753, %s754
          %s756 = smul.addr %s755, 8
          %s757 = scalar_lea.vmem %s4, %s756
        $region56: #{tpu_custom_call.1} parent=43 // pred_fallthru
          _
      $region44: #{tpu_custom_call.1} parent=5 // pred_fallthru
        _
    $region6: #{tpu_custom_call.1} parent=1 // loop_footer
      %s18 = sadd.s32 1, %s14
    $region7: #{tpu_custom_call.1} parent=1 // loop_footer_branch
      %13 = sbr.rel target = $region3
    $region8: #{tpu_custom_call.1} parent=1 // loop_exit
      _
    %758 = vsyncpa [#allocation3], 1
    %s759 = scalar_lea.sflag [#allocation3], 1
    %760 = vsyncpa %s759, 1

</llo_original>
